<compile_context>
chip_gen: v6e
topology: v6e:2x2x1
jax: 0.10.0
libtpu: 0.0.40
codegen_flags: <defaults>
</compile_context>

<pallas_src>
import jax
import jax.numpy as jnp
from jax import lax
from jax.experimental import pallas as pl
from jax.experimental.pallas import tpu as pltpu

_NEG_INF = -1e30


def _round_up(x: int, m: int) -> int:
    return (x + m - 1) // m * m


def _vmem_capacity_bytes() -> int:
    try:
        cap = getattr(pltpu.get_tpu_info(), "vmem_capacity_bytes", None)
        if cap:
            return int(cap)
    except Exception:
        pass
    return 64 * 1024 * 1024  # conservative default (v7x per-core VMEM)


def _choose_tile_rows(bt: int, vp: int, resident_bytes: int, vmem_cap: int) -> int:
    """Pick the largest (tm, Vp) f32 logits tile whose double buffer (+ resident table)
    fits the scoped-VMEM budget, keeping >= 2 grid steps for the parallel axis."""
    budget = min(max(vmem_cap // 4, 8 << 20), 32 << 20)   # ~16 MiB on v7x, 32 MiB v5e/v6e
    budget = max(budget - resident_bytes, 2 << 20)
    tm = budget // (3 * vp * 4)          # 2x pipelined logits block + scratch slack
    tm = max(8, min(1024, (tm // 8) * 8))
    tm = min(tm, max(8, _round_up((bt + 1) // 2, 8)))      # >= 2 tiles when possible
    return tm


# ---------------------------------------------------------------------------
# Shared per-row cross-entropy.  Padded vocab lanes already hold -1e30 (baked
# into the table on the host), so no extra mask is needed here.
# ---------------------------------------------------------------------------
def _row_losses(logits, y_tile):
    tm, vp = logits.shape
    m = jnp.max(logits, axis=-1, keepdims=True)
    lse = m + jnp.log(jnp.sum(jnp.exp(logits - m), axis=-1, keepdims=True))
    col = lax.broadcasted_iota(jnp.int32, (tm, vp), 1)
    picked = jnp.sum(jnp.where(col == y_tile, logits, 0.0), axis=-1, keepdims=True)
    return lse - picked  # (tm, 1) f32


# ---------------------------------------------------------------------------
# Small-vocab fast path: table resident in VMEM, one-hot MXU gather per tile.
# ---------------------------------------------------------------------------
def _onehot_gather(ids_ref, tab_ref):
    tm = ids_ref.shape[0]
    vr = tab_ref.shape[0]
    onehot = (lax.broadcasted_iota(jnp.int32, (tm, vr), 1)
              == ids_ref[...]).astype(jnp.float32)
    # one operand is exact 0/1 -> the matmul reproduces the gathered rows (f32 passes).
    return jnp.dot(onehot, tab_ref[...], preferred_element_type=jnp.float32)


def _dense_embed_kernel(ids_ref, tab_ref, logits_ref):
    logits_ref[...] = _onehot_gather(ids_ref, tab_ref)


def _dense_loss_logits_kernel(ids_ref, tab_ref, y_ref, logits_ref, rowloss_ref):
    logits = _onehot_gather(ids_ref, tab_ref)
    logits_ref[...] = logits
    rowloss_ref[...] = _row_losses(logits, y_ref[...])


def _dense_loss_only_kernel(ids_ref, tab_ref, y_ref, rowloss_ref):
    rowloss_ref[...] = _row_losses(_onehot_gather(ids_ref, tab_ref), y_ref[...])


# ---------------------------------------------------------------------------
# Large-vocab path: table stays in HBM, per-row DMA gather, single batched wait.
# ---------------------------------------------------------------------------
def _gather_rows(ids_ref, emb_hbm, dst_ref, sem, base, tm):
    """DMA `tm` token-indexed embedding rows HBM -> dst_ref (VMEM).

    All starts are issued first (scalar SMEM id reads stay ahead of any wait), then a
    single wait whose descriptor covers the whole (tm, Vp) tile: the DMA semaphore
    accumulates bytes and tm copies of Vp*4 bytes == one (tm, Vp) descriptor.
    """
    base = pl.multiple_of(base, 8)

    def _start(r, carry):
        tok = ids_ref[base + r]
        pltpu.make_async_copy(emb_hbm.at[tok], dst_ref.at[r], sem).start()
        return carry

    lax.fori_loop(0, tm, _start, 0, unroll=True if tm <= 32 else 8)
    pltpu.make_async_copy(emb_hbm.at[pl.ds(0, tm)], dst_ref, sem).wait()


def _make_gather_embed_kernel(tm):
    def kernel(ids_ref, emb_hbm, logits_ref, sem):
        # TODO(synk): for very large V the embed-only path could DMA rows HBM->HBM
        # straight into an ANY-space output, skipping the VMEM round trip.
        _gather_rows(ids_ref, emb_hbm, logits_ref, sem, pl.program_id(0) * tm, tm)
    return kernel


def _make_gather_loss_kernel(tm, with_logits):
    # TODO(synk): overlap the next tile's row gather with this tile's logsumexp via a
    # manual (2, tm, Vp) VMEM double buffer (P4) when the large-V loss path dominates.
    if with_logits:
        def kernel(ids_ref, emb_hbm, y_ref, logits_ref, rowloss_ref, sem):
            _gather_rows(ids_ref, emb_hbm, logits_ref, sem, pl.program_id(0) * tm, tm)
            rowloss_ref[...] = _row_losses(logits_ref[...], y_ref[...])
    else:
        def kernel(ids_ref, emb_hbm, y_ref, rowloss_ref, rowbuf, sem):
            _gather_rows(ids_ref, emb_hbm, rowbuf, sem, pl.program_id(0) * tm, tm)
            rowloss_ref[...] = _row_losses(rowbuf[...], y_ref[...])
    return kernel


# ---------------------------------------------------------------------------
# Wrapper
# ---------------------------------------------------------------------------
def bigram_forward(emb_table, X, y=None, *, tile_rows=None, return_logits=True,
                   force_gather=False):
    """Forward pass of BigramLanguageModel.

    Returns (logits, loss):
      - y is None:                       logits (B, T, V), loss None
      - y given:                         logits (B*T, V), scalar loss
      - y given, return_logits=False:    (None, scalar loss)   # skips logits writeback
    """
    V = emb_table.shape[0]
    B, T = X.shape
    BT = B * T
    Vp = _round_up(V, 128)

    vmem_cap = _vmem_capacity_bytes()

    # Small-vocab fast path: keep the padded table resident in VMEM.
    Vr_dense = _round_up(V, 128)
    dense_table_bytes = 2 * Vr_dense * Vp * 4       # count the double buffer
    use_dense = (not force_gather) and dense_table_bytes <= min(8 << 20, vmem_cap // 8)

    if tile_rows is None:
        tm = _choose_tile_rows(BT, Vp, dense_table_bytes if use_dense else 0, vmem_cap)
    else:
        tm = _round_up(int(tile_rows), 8)
    BTp = _round_up(BT, tm)
    num_tiles = BTp // tm

    params = pltpu.CompilerParams(
        dimension_semantics=("parallel",),
        vmem_limit_bytes=int(min(vmem_cap * 4 // 5, 112 << 20)),
    )

    ids_flat = jnp.zeros((BTp,), jnp.int32).at[:BT].set(X.reshape(-1).astype(jnp.int32))
    if y is not None:
        y2d = jnp.zeros((BTp, 1), jnp.int32).at[:BT, 0].set(
            y.reshape(-1).astype(jnp.int32))

    # Pad the vocab axis to a lane-dense multiple of 128 and bake the softmax mask
    # into the table (-1e30 padded columns), so no per-tile masking is needed.
    emb_f32 = emb_table.astype(jnp.float32)
    if Vp != V:
        emb_f32 = jnp.pad(emb_f32, ((0, 0), (0, Vp - V)), constant_values=_NEG_INF)

    logits_shape = jax.ShapeDtypeStruct((BTp, Vp), jnp.float32)
    rowloss_shape = jax.ShapeDtypeStruct((BTp, 1), jnp.float32)

    if use_dense:
        tab = emb_f32
        if Vr_dense != V:
            tab = jnp.pad(tab, ((0, Vr_dense - V), (0, 0)))
        ids2d = ids_flat[:, None]

        ids_spec = pl.BlockSpec((tm, 1), lambda t: (t, 0))
        tab_spec = pl.BlockSpec((Vr_dense, Vp), lambda t: (0, 0))   # resident table
        y_spec = pl.BlockSpec((tm, 1), lambda t: (t, 0))
        logits_spec = pl.BlockSpec((tm, Vp), lambda t: (t, 0))
        rowloss_spec = pl.BlockSpec((tm, 1), lambda t: (t, 0))

        if y is None:
            out = pl.pallas_call(
                _dense_embed_kernel,
                out_shape=logits_shape,
                grid=(num_tiles,),
                in_specs=[ids_spec, tab_spec],
                out_specs=logits_spec,
                compiler_params=params,
            )(ids2d, tab)
            return out[:BT, :V].reshape(B, T, V), None

        if return_logits:
            logits, rowloss = pl.pallas_call(
                _dense_loss_logits_kernel,
                out_shape=(logits_shape, rowloss_shape),
                grid=(num_tiles,),
                in_specs=[ids_spec, tab_spec, y_spec],
                out_specs=(logits_spec, rowloss_spec),
                compiler_params=params,
            )(ids2d, tab, y2d)
            return logits[:BT, :V], jnp.sum(rowloss[:BT, 0]) / BT

        rowloss = pl.pallas_call(
            _dense_loss_only_kernel,
            out_shape=rowloss_shape,
            grid=(num_tiles,),
            in_specs=[ids_spec, tab_spec, y_spec],
            out_specs=rowloss_spec,
            compiler_params=params,
        )(ids2d, tab, y2d)
        return None, jnp.sum(rowloss[:BT, 0]) / BT

    # ---- Large-vocab path: HBM table + scalar-prefetched ids, per-row DMA gather ----
    rows_g = max(_round_up(V, 8), tm)   # the batched-wait descriptor slices tm rows
    emb_g = emb_f32
    if rows_g != V:
        emb_g = jnp.pad(emb_g, ((0, rows_g - V), (0, 0)))

    hbm_spec = pl.BlockSpec(memory_space=pl.ANY)
    logits_spec = pl.BlockSpec((tm, Vp), lambda t, ids: (t, 0))
    y_spec = pl.BlockSpec((tm, 1), lambda t, ids: (t, 0))
    rowloss_spec = pl.BlockSpec((tm, 1), lambda t, ids: (t, 0))

    if y is None:
        out = pl.pallas_call(
            _make_gather_embed_kernel(tm),
            out_shape=logits_shape,
            grid_spec=pltpu.PrefetchScalarGridSpec(
                num_scalar_prefetch=1,
                grid=(num_tiles,),
                in_specs=[hbm_spec],
                out_specs=logits_spec,
                scratch_shapes=[pltpu.SemaphoreType.DMA(())],
            ),
            compiler_params=params,
        )(ids_flat, emb_g)
        return out[:BT, :V].reshape(B, T, V), None

    if return_logits:
        logits, rowloss = pl.pallas_call(
            _make_gather_loss_kernel(tm, True),
            out_shape=(logits_shape, rowloss_shape),
            grid_spec=pltpu.PrefetchScalarGridSpec(
                num_scalar_prefetch=1,
                grid=(num_tiles,),
                in_specs=[hbm_spec, y_spec],
                out_specs=(logits_spec, rowloss_spec),
                scratch_shapes=[pltpu.SemaphoreType.DMA(())],
            ),
            compiler_params=params,
        )(ids_flat, emb_g, y2d)
        return logits[:BT, :V], jnp.sum(rowloss[:BT, 0]) / BT

    rowloss = pl.pallas_call(
        _make_gather_loss_kernel(tm, False),
        out_shape=rowloss_shape,
        grid_spec=pltpu.PrefetchScalarGridSpec(
            num_scalar_prefetch=1,
            grid=(num_tiles,),
            in_specs=[hbm_spec, y_spec],
            out_specs=rowloss_spec,
            scratch_shapes=[
                pltpu.VMEM((tm, Vp), jnp.float32),
                pltpu.SemaphoreType.DMA(()),
            ],
        ),
        compiler_params=params,
    )(ids_flat, emb_g, y2d)
    return None, jnp.sum(rowloss[:BT, 0]) / BT


if __name__ == "__main__":
    # Char-level-ish vocab (not 128 aligned -> exercises padding), batch=2, seq=8.
    V, B, T = 65, 2, 8
    BT = B * T
    key = jax.random.PRNGKey(0)
    k_emb, k_x, k_y = jax.random.split(key, 3)

    emb_table = jax.random.normal(k_emb, (V, V), dtype=jnp.float32)
    X = jax.random.randint(k_x, (B, T), 0, V, dtype=jnp.int32)
    y = jax.random.randint(k_y, (B, T), 0, V, dtype=jnp.int32)

    # Plain-JAX reference (exact gather + logsumexp cross entropy, mean reduction).
    ref_logits = emb_table[X.reshape(-1)]
    ref_lse = jax.nn.logsumexp(ref_logits, axis=-1)
    ref_loss = jnp.mean(ref_lse - ref_logits[jnp.arange(BT), y.reshape(-1)])

    # 1) Small-vocab resident-table path (auto tile size), with targets.
    logits, loss = bigram_forward(emb_table, X, y)
    logits, loss = jax.block_until_ready((logits, loss))
    assert logits.shape == (BT, V)
    assert jnp.allclose(logits, ref_logits, atol=1e-5, rtol=1e-5), "dense logits mismatch"
    assert jnp.allclose(loss, ref_loss, atol=1e-5, rtol=1e-5), "dense loss mismatch"

    # 2) Loss-only variant (skips the logits writeback).
    _, loss_only = bigram_forward(emb_table, X, y, return_logits=False)
    loss_only = jax.block_until_ready(loss_only)
    assert jnp.allclose(loss_only, ref_loss, atol=1e-5, rtol=1e-5)

    # 3) No targets: logits (B, T, V), loss None.
    logits3, none_loss = bigram_forward(emb_table, X, None)
    logits3 = jax.block_until_ready(logits3)
    assert logits3.shape == (B, T, V) and none_loss is None
    assert jnp.allclose(logits3.reshape(BT, V), ref_logits, atol=1e-5, rtol=1e-5)

    # 4) Large-vocab HBM DMA-gather path (forced here at the small demo shape).
    gl, gloss = bigram_forward(emb_table, X, y, tile_rows=8, force_gather=True)
    gl, gloss = jax.block_until_ready((gl, gloss))
    assert jnp.allclose(gl, ref_logits, atol=1e-6, rtol=1e-6), "gather logits mismatch"
    assert jnp.allclose(gloss, ref_loss, atol=1e-5, rtol=1e-5)

    _, gloss2 = bigram_forward(emb_table, X, y, tile_rows=8, force_gather=True,
                               return_logits=False)
    gloss2 = jax.block_until_ready(gloss2)
    assert jnp.allclose(gloss2, ref_loss, atol=1e-5, rtol=1e-5)

    ge, _ = bigram_forward(emb_table, X, None, tile_rows=8, force_gather=True)
    ge = jax.block_until_ready(ge)
    assert jnp.allclose(ge.reshape(BT, V), ref_logits, atol=1e-6, rtol=1e-6)

    # TODO(synk): generate() is a host-side autoregressive torch.multinomial sampling
    # loop; not a kernel hot path, left to the caller.
    print("KERNEL_OK")
</pallas_src>

<mosaic_0001>
module attributes {stable_mosaic.version = 11 : i64} {
  func.func @_dense_loss_logits_kernel(%arg0: i32, %arg1: memref<8x1xi32, #tpu.memory_space<vmem>>, %arg2: memref<128x128xf32, #tpu.memory_space<vmem>>, %arg3: memref<8x1xi32, #tpu.memory_space<vmem>>, %arg4: memref<8x128xf32, #tpu.memory_space<vmem>>, %arg5: memref<8x1xf32, #tpu.memory_space<vmem>>) attributes {dimension_semantics = [#tpu.dimension_semantics<parallel>], iteration_bounds = array<i64: 2>, scalar_prefetch = 0 : i64, scratch_operands = 0 : i64, tpu.core_type = #tpu.core_type<tc>, window_params = [{transform_indices = @transform_0, window_bounds = array<i64: 8, 1>}, {pipeline_mode = #tpu.pipeline_mode<synchronous>, transform_indices = @transform_1, window_bounds = array<i64: 128, 128>}, {transform_indices = @transform_2, window_bounds = array<i64: 8, 1>}, {transform_indices = @transform_3, window_bounds = array<i64: 8, 128>}, {transform_indices = @transform_4, window_bounds = array<i64: 8, 1>}]} {
    %0 = tpu.iota {dimensions = array<i32: 1>} : vector<8x128xi32>
    %c0 = arith.constant 0 : index
    %c0_0 = arith.constant 0 : index
    %1 = vector.load %arg1[%c0, %c0_0] : memref<8x1xi32, #tpu.memory_space<vmem>>, vector<8x1xi32>
    %2 = vector.broadcast %1 : vector<8x1xi32> to vector<8x128xi32>
    %3 = arith.cmpi eq, %0, %2 : vector<8x128xi32>
    %4 = arith.extui %3 : vector<8x128xi1> to vector<8x128xi32>
    %5 = arith.sitofp %4 : vector<8x128xi32> to vector<8x128xf32>
    %c0_1 = arith.constant 0 : index
    %c0_2 = arith.constant 0 : index
    %6 = vector.load %arg2[%c0_1, %c0_2] : memref<128x128xf32, #tpu.memory_space<vmem>>, vector<128x128xf32>
    %cst = arith.constant dense<0.000000e+00> : vector<8x128xf32>
    %7 = tpu.matmul %5, %6, %cst {dimension_numbers = #tpu.dot_dimension_numbers<[1], [0], [0], [1], [0, 0, 1, 1], [], []>} : vector<8x128xf32>, vector<128x128xf32>, vector<8x128xf32> -> vector<8x128xf32>
    %c0_3 = arith.constant 0 : index
    %c0_4 = arith.constant 0 : index
    %8 = vector.load %arg4[%c0_3, %c0_4] : memref<8x128xf32, #tpu.memory_space<vmem>>, vector<8x128xf32>
    tpu.vector_store %arg4[%c0_3, %c0_4], %7 {strides = array<i32>} : memref<8x128xf32, #tpu.memory_space<vmem>>, vector<8x128xf32>,
    %c0_5 = arith.constant 0 : index
    %c0_6 = arith.constant 0 : index
    %9 = vector.load %arg3[%c0_5, %c0_6] : memref<8x1xi32, #tpu.memory_space<vmem>>, vector<8x1xi32>
    %cst_7 = arith.constant dense<0xFF800000> : vector<8xf32>
    %10 = vector.multi_reduction <maximumf>, %7, %cst_7 [1] : vector<8x128xf32> to vector<8xf32>
    %11 = vector.shape_cast %10 : vector<8xf32> to vector<8x1xf32>
    %12 = vector.broadcast %11 : vector<8x1xf32> to vector<8x128xf32>
    %13 = arith.subf %7, %12 : vector<8x128xf32>
    %14 = math.exp %13 : vector<8x128xf32>
    %cst_8 = arith.constant dense<0.000000e+00> : vector<8xf32>
    %15 = vector.multi_reduction <add>, %14, %cst_8 [1] : vector<8x128xf32> to vector<8xf32>
    %16 = vector.shape_cast %15 : vector<8xf32> to vector<8x1xf32>
    %17 = math.log %16 : vector<8x1xf32>
    %18 = arith.addf %11, %17 : vector<8x1xf32>
    %19 = tpu.iota {dimensions = array<i32: 1>} : vector<8x128xi32>
    %20 = vector.broadcast %9 : vector<8x1xi32> to vector<8x128xi32>
    %21 = arith.cmpi eq, %19, %20 : vector<8x128xi32>
    %cst_9 = arith.constant 0.000000e+00 : f32
    %22 = vector.broadcast %cst_9 : f32 to vector<8x128xf32>
    %23 = arith.select %21, %7, %22 : vector<8x128xi1>, vector<8x128xf32>
    %cst_10 = arith.constant dense<0.000000e+00> : vector<8xf32>
    %24 = vector.multi_reduction <add>, %23, %cst_10 [1] : vector<8x128xf32> to vector<8xf32>
    %25 = vector.shape_cast %24 : vector<8xf32> to vector<8x1xf32>
    %26 = arith.subf %18, %25 : vector<8x1xf32>
    %c0_11 = arith.constant 0 : index
    %c0_12 = arith.constant 0 : index
    %27 = vector.load %arg5[%c0_11, %c0_12] : memref<8x1xf32, #tpu.memory_space<vmem>>, vector<8x1xf32>
    tpu.vector_store %arg5[%c0_11, %c0_12], %26 {strides = array<i32>} : memref<8x1xf32, #tpu.memory_space<vmem>>, vector<8x1xf32>,
    return
  }
  func.func @transform_0(%arg0: i32) -> (i32, i32) {
    %c0_i32 = arith.constant 0 : i32
    %c0_i32_0 = arith.constant 0 : i32
    return %arg0, %c0_i32 : i32, i32
  }
  func.func @transform_1(%arg0: i32) -> (i32, i32) {
    %c0_i32 = arith.constant 0 : i32
    %c0_i32_0 = arith.constant 0 : i32
    %c0_i32_1 = arith.constant 0 : i32
    return %c0_i32, %c0_i32_0 : i32, i32
  }
  func.func @transform_2(%arg0: i32) -> (i32, i32) {
    %c0_i32 = arith.constant 0 : i32
    %c0_i32_0 = arith.constant 0 : i32
    return %arg0, %c0_i32 : i32, i32
  }
  func.func @transform_3(%arg0: i32) -> (i32, i32) {
    %c0_i32 = arith.constant 0 : i32
    %c0_i32_0 = arith.constant 0 : i32
    return %arg0, %c0_i32 : i32, i32
  }
  func.func @transform_4(%arg0: i32) -> (i32, i32) {
    %c0_i32 = arith.constant 0 : i32
    %c0_i32_0 = arith.constant 0 : i32
    return %arg0, %c0_i32 : i32, i32
  }
}

</mosaic_0001>

<llo_original>
// kernel: tpu_custom_call.1
$region0: #{tpu_custom_call.1}
  #allocation0 [shape = 'u32[]', space=smem, size = 0x4, offset = 0x4, fixed_abs, tag = 'smem constant byte address 0x4 - core index']
  #allocation1 [shape = 'u32[144,128]{1,0:T(1,128)}', space=vmem, size = 0x12000, scoped, tag = 'internal scratch']
  %s0 = inlined_call_operand.vmem [shape: s32[16,1], index: 0, kind: input, shape index: {}]
  %s1 = inlined_call_operand.hbm [shape: f32[128,128], index: 1, kind: input, shape index: {}]
  %s2 = inlined_call_operand.vmem [shape: s32[16,1], index: 2, kind: input, shape index: {}]
  %s3 = inlined_call_operand.hbm [shape: f32[16,128], index: 3, kind: output, shape index: {0}]
  %s4 = inlined_call_operand.vmem [shape: f32[16,1], index: 4, kind: output, shape index: {1}]
  %5 = xla_tuple %s3, %s4
  %s6 = sld [smem:[#allocation0]]
  $region57: #{tpu_custom_call.1} parent=0
    _
  %s8 = ssub.s32 1, %s6
  %s9 = scalar_select 0, %s8, %s6
  $region1: #{tpu_custom_call.1} parent=0
    #allocation2 [shape = 'u8[65536]{0}', space=vmem, size = 0x10000, scoped, tag = 'input window, operand 1, single buffered']
    #allocation3 [shape = 's32[2]{0}', space=sflag, size = 0x8, scoped, tag = 'scoped memory for tpu_custom_call.1']
    #allocation4 [shape = 's32[2]{0}', space=sflag, size = 0x8, scoped, tag = 'scoped memory for tpu_custom_call.1']
    #allocation5 [shape = 'u8[8192]{0}', space=vmem, size = 0x2000, scoped, tag = 'output window, operand 0']
    %10 = vsyncpa [#allocation3], 0
    %11 = vsyncpa [#allocation4], 0
    %s12 = scalar_lea.sflag [#allocation4], 1
    %13 = vsyncpa %s12, 0
    loop: start=0, step=1, limit=4
    $region2: #{tpu_custom_call.1} parent=1 // loop_pre_header
      _
    $region3: #{tpu_custom_call.1} parent=1 // loop_header
      %s15 = sphi 0, %s19
      %p16 = scmp.ge.s32.totalorder %s15, 4
      %s25 = sphi 0, %s27
      %s28 = sphi 0, %s25
      %s29 = sphi 0, %s28
      %s45 = sphi 0, %s29
      %s49 = sphi 0, %s49
      %s51 = sphi 0, %s49
      %s52 = sphi 0, %s51
      %s66 = sphi 0, %s52
      %s72 = sphi 0, %s74
      %s75 = sphi 0, %s72
      %s76 = sphi 0, %s75
      %s92 = sphi 0, %s76
      %s98 = sphi 0, %s100
      %s101 = sphi 0, %s98
      %s102 = sphi 0, %s101
      %s118 = sphi 0, %s102
      %s124 = sphi 0, %s126
      %s127 = sphi 0, %s124
      %s128 = sphi 0, %s127
      %s144 = sphi 0, %s128
    $region4: #{tpu_custom_call.1} parent=1 // loop_header_branch
      %18 = sbr.rel (%p16) target = $region8
    $region5: #{tpu_custom_call.1} parent=1 // loop_body
      %s20 = ssub.s32 %s15, 1
      %s21 = ssub.s32 %s15, 2
      %s22 = sadd.s32 %s15, 1
      %s23 = ssub.s32 %s15, %s22
      %p24 = scmp.eq.s32.totalorder %s23, 0
      %s26 = sadd.s32 %s25, 1
      %s27 = scalar_select %p24, %s25, %s26
      %p30 = pneg %p24
      %p31 = scmp.eq.s32.totalorder %s15, 1
      %p32 = por %p30, %p31
      %p33 = scmp.ne.s32.totalorder %s25, %s28
      %p34 = scmp.eq.s32.totalorder %s15, 0
      %p35 = por %p33, %p34
      %p36 = scmp.ne.s32.totalorder %s25, %s28
      %p37 = scmp.eq.s32.totalorder %s20, 1
      %p38 = por %p36, %p37
      %p39 = scmp.ne.s32.totalorder %s28, %s29
      %p40 = scmp.eq.s32.totalorder %s20, 0
      %p41 = por %p39, %p40
      %p42 = scmp.ne.s32.totalorder %s28, %s29
      %p43 = scmp.eq.s32.totalorder %s21, 1
      %p44 = por %p42, %p43
      %p46 = scmp.ne.s32.totalorder %s29, %s45
      %p47 = scmp.eq.s32.totalorder %s21, 0
      %p48 = por %p46, %p47
      %s50 = sadd.s32 %s49, 1
      %p53 = scmp.eq.s32.totalorder %s15, 1
      %p54 = scmp.ne.s32.totalorder %s49, %s51
      %p55 = scmp.eq.s32.totalorder %s15, 0
      %p56 = por %p54, %p55
      %p57 = scmp.ne.s32.totalorder %s49, %s51
      %p58 = scmp.eq.s32.totalorder %s20, 1
      %p59 = por %p57, %p58
      %p60 = scmp.ne.s32.totalorder %s51, %s52
      %p61 = scmp.eq.s32.totalorder %s20, 0
      %p62 = por %p60, %p61
      %p63 = scmp.ne.s32.totalorder %s51, %s52
      %p64 = scmp.eq.s32.totalorder %s21, 1
      %p65 = por %p63, %p64
      %p67 = scmp.ne.s32.totalorder %s52, %s66
      %p68 = scmp.eq.s32.totalorder %s21, 0
      %p69 = por %p67, %p68
      %s70 = ssub.s32 %s15, %s22
      %p71 = scmp.eq.s32.totalorder %s70, 0
      %s73 = sadd.s32 %s72, 1
      %s74 = scalar_select %p71, %s72, %s73
      %p77 = pneg %p71
      %p78 = scmp.eq.s32.totalorder %s15, 1
      %p79 = por %p77, %p78
      %p80 = scmp.ne.s32.totalorder %s72, %s75
      %p81 = scmp.eq.s32.totalorder %s15, 0
      %p82 = por %p80, %p81
      %p83 = scmp.ne.s32.totalorder %s72, %s75
      %p84 = scmp.eq.s32.totalorder %s20, 1
      %p85 = por %p83, %p84
      %p86 = scmp.ne.s32.totalorder %s75, %s76
      %p87 = scmp.eq.s32.totalorder %s20, 0
      %p88 = por %p86, %p87
      %p89 = scmp.ne.s32.totalorder %s75, %s76
      %p90 = scmp.eq.s32.totalorder %s21, 1
      %p91 = por %p89, %p90
      %p93 = scmp.ne.s32.totalorder %s76, %s92
      %p94 = scmp.eq.s32.totalorder %s21, 0
      %p95 = por %p93, %p94
      %s96 = ssub.s32 %s15, %s22
      %p97 = scmp.eq.s32.totalorder %s96, 0
      %s99 = sadd.s32 %s98, 1
      %s100 = scalar_select %p97, %s98, %s99
      %p103 = pneg %p97
      %p104 = scmp.eq.s32.totalorder %s15, 1
      %p105 = por %p103, %p104
      %p106 = scmp.ne.s32.totalorder %s98, %s101
      %p107 = scmp.eq.s32.totalorder %s15, 0
      %p108 = por %p106, %p107
      %p109 = scmp.ne.s32.totalorder %s98, %s101
      %p110 = scmp.eq.s32.totalorder %s20, 1
      %p111 = por %p109, %p110
      %p112 = scmp.ne.s32.totalorder %s101, %s102
      %p113 = scmp.eq.s32.totalorder %s20, 0
      %p114 = por %p112, %p113
      %p115 = scmp.ne.s32.totalorder %s101, %s102
      %p116 = scmp.eq.s32.totalorder %s21, 1
      %p117 = por %p115, %p116
      %p119 = scmp.ne.s32.totalorder %s102, %s118
      %p120 = scmp.eq.s32.totalorder %s21, 0
      %p121 = por %p119, %p120
      %s122 = ssub.s32 %s15, %s22
      %p123 = scmp.eq.s32.totalorder %s122, 0
      %s125 = sadd.s32 %s124, 1
      %s126 = scalar_select %p123, %s124, %s125
      %p129 = pneg %p123
      %p130 = scmp.eq.s32.totalorder %s15, 1
      %p131 = por %p129, %p130
      %p132 = scmp.ne.s32.totalorder %s124, %s127
      %p133 = scmp.eq.s32.totalorder %s15, 0
      %p134 = por %p132, %p133
      %p135 = scmp.ne.s32.totalorder %s124, %s127
      %p136 = scmp.eq.s32.totalorder %s20, 1
      %p137 = por %p135, %p136
      %p138 = scmp.ne.s32.totalorder %s127, %s128
      %p139 = scmp.eq.s32.totalorder %s20, 0
      %p140 = por %p138, %p139
      %p141 = scmp.ne.s32.totalorder %s127, %s128
      %p142 = scmp.eq.s32.totalorder %s21, 1
      %p143 = por %p141, %p142
      %p145 = scmp.ne.s32.totalorder %s128, %s144
      %p146 = scmp.eq.s32.totalorder %s21, 0
      %p147 = por %p145, %p146
      %p148 = scmp.le.s32.totalorder 1, %s15
      %p149 = scmp.lt.s32.totalorder %s15, 3
      %p150 = pnand %p148, %p149
      %p151 = pneg %p150
      // Predicated region
      $region9: #{tpu_custom_call.1} parent=5 // pred_check
        _
      $region10: #{tpu_custom_call.1} parent=5 // pred_check_branch
        %153 = sbr.rel (%p150) target = $region12
      $region11: #{tpu_custom_call.1} parent=5 // pred_region
        %s154 = ssub.s32 %s15, 1
        // Predicated region
        $region13: #{tpu_custom_call.1} parent=11 // pred_check
          %p155 = pneg %p62
        $region14: #{tpu_custom_call.1} parent=11 // pred_check_branch
          %157 = sbr.rel (%p155) target = $region16
        $region15: #{tpu_custom_call.1} parent=11 // pred_region
          %s159 = ssub.s32 2048, 2048
          %160 = vsyncadd [#allocation3], %s159
          %s161 = sshll.u32 [#allocation2], 4
          %s162 = int_to_ptr.vmem [resolvable:$true] %s161
          %167 = dma.hbm_to_vmem [thread:$0]  %s1, 2048, %s162, [#allocation3], 128, 128, 8
        $region16: #{tpu_custom_call.1} parent=11 // pred_fallthru
          _
      $region12: #{tpu_custom_call.1} parent=5 // pred_fallthru
        _
      %p168 = scmp.lt.s32.totalorder %s15, 2
      // Predicated region
      $region17: #{tpu_custom_call.1} parent=5 // pred_check
        %p169 = pneg %p168
      $region18: #{tpu_custom_call.1} parent=5 // pred_check_branch
        %171 = sbr.rel (%p169) target = $region20
      $region19: #{tpu_custom_call.1} parent=5 // pred_region
        // Predicated region
        $region21: #{tpu_custom_call.1} parent=19 // pred_check
          %p172 = pneg %p35
        $region22: #{tpu_custom_call.1} parent=19 // pred_check_branch
          %174 = sbr.rel (%p172) target = $region24
        $region23: #{tpu_custom_call.1} parent=19 // pred_region
          %p175 = scmp.lt.s32.totalorder %s15, 1
          %s176 = scalar_select %p175, %s15, 1
          %s177 = smul.addr %s176, 8
          %s178 = scalar_lea.vmem %s0, %s177
        $region24: #{tpu_custom_call.1} parent=19 // pred_fallthru
          _
        // Predicated region
        $region25: #{tpu_custom_call.1} parent=19 // pred_check
          %p179 = pneg %p82
        $region26: #{tpu_custom_call.1} parent=19 // pred_check_branch
          %181 = sbr.rel (%p179) target = $region28
        $region27: #{tpu_custom_call.1} parent=19 // pred_region
          %p182 = scmp.lt.s32.totalorder %s15, 1
          %s183 = scalar_select %p182, %s15, 1
          %s184 = smul.addr %s183, 8
          %s185 = scalar_lea.vmem %s2, %s184
        $region28: #{tpu_custom_call.1} parent=19 // pred_fallthru
          _
      $region20: #{tpu_custom_call.1} parent=5 // pred_fallthru
        _
      %p186 = scmp.le.s32.totalorder 1, %s15
      %p187 = scmp.lt.s32.totalorder %s15, 3
      %p188 = pnand %p186, %p187
      %p189 = pneg %p188
      // Predicated region
      $region29: #{tpu_custom_call.1} parent=5 // pred_check
        _
      $region30: #{tpu_custom_call.1} parent=5 // pred_check_branch
        %191 = sbr.rel (%p188) target = $region32
      $region31: #{tpu_custom_call.1} parent=5 // pred_region
        %s192 = ssub.s32 %s15, 1
        // Predicated region
        $region33: #{tpu_custom_call.1} parent=31 // pred_check
          %p193 = pneg %p62
        $region34: #{tpu_custom_call.1} parent=31 // pred_check_branch
          %195 = sbr.rel (%p193) target = $region36
        $region35: #{tpu_custom_call.1} parent=31 // pred_region
          %196 = dma.done [#allocation3], 2048
        $region36: #{tpu_custom_call.1} parent=31 // pred_fallthru
          _
        %p197 = scmp.lt.s32.totalorder %s20, 1
        %s198 = scalar_select %p197, %s20, 1
        %s199 = smul.addr %s198, 8
        %s200 = scalar_lea.vmem %s0, %s199
        %p201 = pneg %p41
        %p202 = pneg %p38
        %p203 = pneg %p62
        %p204 = pneg %p59
        %p205 = scmp.lt.s32.totalorder %s20, 1
        %s206 = scalar_select %p205, %s20, 1
        %s207 = smul.addr %s206, 8
        %s208 = scalar_lea.vmem %s2, %s207
        %p209 = pneg %p88
        %p210 = pneg %p85
        %p211 = pneg %p114
        %p212 = pneg %p111
        %s213 = sand.u32 %s101, 1
        %s214 = scalar_lea.sflag [#allocation4], %s213
        %s215 = sand.u32 %s101, 1
        %s216 = smul.addr %s215, 8
        %s217 = scalar_lea.vmem [#allocation5], %s216
        %p218 = pneg %p140
        %p219 = pneg %p137
        %p220 = scmp.lt.s32.totalorder %s20, 1
        %s221 = scalar_select %p220, %s20, 1
        %s222 = smul.addr %s221, 8
        %s223 = scalar_lea.vmem %s4, %s222
        %p224 = scmp.lt.s32.totalorder %s20, 1
        %s225 = scalar_select %p224, %s20, 1
        %s226 = smul.addr %s225, 8
        %s227 = scalar_lea.vmem %s0, %s226
        %p228 = scmp.lt.s32.totalorder %s20, 1
        %s229 = scalar_select %p228, %s20, 1
        %s230 = smul.addr %s229, 8
        %s231 = scalar_lea.vmem %s2, %s230
        %p232 = scmp.lt.s32.totalorder %s20, 1
        %s233 = scalar_select %p232, %s20, 1
        %s234 = smul.addr %s233, 8
        %s235 = scalar_lea.vmem %s4, %s234
        %v236 = vlaneseq
        %v237 = vand.u32 %v236, 127
        %v238 = vld [vmem:[%s227] sm:$0xff]
        %239 = vset.pattern.permute.xlu0 0
        %240 = vperm.xlu0 %239, %v238
        %v241 = vpop.permute.xlu0 %240
        %vm242 = vcmp.eq.s32.totalorder %v237, %v241
        %v243 = vsel %vm242, 1, 0
        %v244 = vcvt.s32.f32 %v243
        %v245 = vld [vmem:[#allocation2] sm:$0xff]
        %v246 = vld [vmem:[#allocation2 + $0x8] sm:$0xff]
        %v247 = vld [vmem:[#allocation2 + $0x10] sm:$0xff]
        %v248 = vld [vmem:[#allocation2 + $0x18] sm:$0xff]
        %v249 = vld [vmem:[#allocation2 + $0x20] sm:$0xff]
        %v250 = vld [vmem:[#allocation2 + $0x28] sm:$0xff]
        %v251 = vld [vmem:[#allocation2 + $0x30] sm:$0xff]
        %v252 = vld [vmem:[#allocation2 + $0x38] sm:$0xff]
        %v253 = vld [vmem:[#allocation2 + $0x40] sm:$0xff]
        %v254 = vld [vmem:[#allocation2 + $0x48] sm:$0xff]
        %v255 = vld [vmem:[#allocation2 + $0x50] sm:$0xff]
        %v256 = vld [vmem:[#allocation2 + $0x58] sm:$0xff]
        %v257 = vld [vmem:[#allocation2 + $0x60] sm:$0xff]
        %v258 = vld [vmem:[#allocation2 + $0x68] sm:$0xff]
        %v259 = vld [vmem:[#allocation2 + $0x70] sm:$0xff]
        %v260 = vld [vmem:[#allocation2 + $0x78] sm:$0xff]
        %261 = vmatprep.subr.mxu0 0.0
        %262 = vmatpush1.msra.mxu0 %v260
        %263 = vmatprep.subr.mxu0 0.0
        %264 = vmatpush1.msra.mxu0 %v259
        %265 = vmatprep.subr.mxu0 0.0
        %266 = vmatpush1.msra.mxu0 %v258
        %267 = vmatprep.subr.mxu0 0.0
        %268 = vmatpush1.msra.mxu0 %v257
        %269 = vmatprep.subr.mxu0 0.0
        %270 = vmatpush1.msra.mxu0 %v256
        %271 = vmatprep.subr.mxu0 0.0
        %272 = vmatpush1.msra.mxu0 %v255
        %273 = vmatprep.subr.mxu0 0.0
        %274 = vmatpush1.msra.mxu0 %v254
        %275 = vmatprep.subr.mxu0 0.0
        %276 = vmatpush1.msra.mxu0 %v253
        %277 = vmatprep.subr.mxu0 0.0
        %278 = vmatpush1.msra.mxu0 %v252
        %279 = vmatprep.subr.mxu0 0.0
        %280 = vmatpush1.msra.mxu0 %v251
        %281 = vmatprep.subr.mxu0 0.0
        %282 = vmatpush1.msra.mxu0 %v250
        %283 = vmatprep.subr.mxu0 0.0
        %284 = vmatpush1.msra.mxu0 %v249
        %285 = vmatprep.subr.mxu0 0.0
        %286 = vmatpush1.msra.mxu0 %v248
        %287 = vmatprep.subr.mxu0 0.0
        %288 = vmatpush1.msra.mxu0 %v247
        %289 = vmatprep.subr.mxu0 0.0
        %290 = vmatpush1.msra.mxu0 %v246
        %291 = vmatprep.subr.mxu0 0.0
        %292 = vmatpush1.msra.mxu0 %v245
        %293 = vmatprep.subr.mxu0 0.0
        %294 = vmatpush2.msra.mxu0 0.0
        %295 = vmatprep.subr.mxu0 0.0
        %296 = vmatpush2.msra.mxu0 0.0
        %297 = vmatprep.subr.mxu0 0.0
        %298 = vmatpush2.msra.mxu0 0.0
        %299 = vmatprep.subr.mxu0 0.0
        %300 = vmatpush2.msra.mxu0 0.0
        %301 = vmatprep.subr.mxu0 0.0
        %302 = vmatpush2.msra.mxu0 0.0
        %303 = vmatprep.subr.mxu0 0.0
        %304 = vmatpush2.msra.mxu0 0.0
        %305 = vmatprep.subr.mxu0 0.0
        %306 = vmatpush2.msra.mxu0 0.0
        %307 = vmatprep.subr.mxu0 0.0
        %308 = vmatpush2.msra.mxu0 0.0
        %309 = vmatprep.subr.mxu0 0.0
        %310 = vmatpush2.msra.mxu0 0.0
        %311 = vmatprep.subr.mxu0 0.0
        %312 = vmatpush2.msra.mxu0 0.0
        %313 = vmatprep.subr.mxu0 0.0
        %314 = vmatpush2.msra.mxu0 0.0
        %315 = vmatprep.subr.mxu0 0.0
        %316 = vmatpush2.msra.mxu0 0.0
        %317 = vmatprep.subr.mxu0 0.0
        %318 = vmatpush2.msra.mxu0 0.0
        %319 = vmatprep.subr.mxu0 0.0
        %320 = vmatpush2.msra.mxu0 0.0
        %321 = vmatprep.subr.mxu0 0.0
        %322 = vmatpush2.msra.mxu0 0.0
        %323 = vmatprep.subr.mxu0 0.0
        %324 = vmatpush2.msra.mxu0 0.0
        %325 = vmatprep.mubr.f32.mxu0 0.0
        %326 = vmatmul.mubr.f32.gmra.mxu0 %v244
        %v327 = vpop.f32.mrf.mxu0
        %v328 = vadd.f32 0.0, %v327
        %v329 = vpop.f32.mrf.mxu0
        %330 = vdwg.mxu0
        %331 = vst [vmem:[%s217] sm:$0xff] %v328
        %v332 = vld [vmem:[%s231] sm:$0xff]
        %333 = vmax.xlane.f32.xlu0 %v328
        %v334 = vpop.xlane.xlu0 %333
        %v335 = vsub.f32 %v328, %v334
        %v336 = vmul.f32 %v335, 1.442695
        %v337 = vpow.pop %v336
        %338 = vadd.xlane.f32.xlu0 %v337
        %v339 = vpop.xlane.xlu0 %338
        %v340 = vlog2.pop %v339
        %v341 = vmul.f32 %v340, 0.6931472
        %v342 = vadd.f32 %v334, %v341
        %343 = vset.pattern.permute.xlu0 0
        %344 = vperm.xlu0 %343, %v332
        %v345 = vpop.permute.xlu0 %344
        %vm346 = vcmp.eq.s32.totalorder %v237, %v345
        %v347 = vsel %vm346, %v328, 0.0
        %348 = vadd.xlane.f32.xlu0 %v347
        %v349 = vpop.xlane.xlu0 %348
        %v350 = vsub.f32 %v342, %v349
        %vm351 = vcmask 7168
        %352 = vst.msk [vmem:[%s235] sm:$0xff] %vm351, %v350
        %s353 = sand.u32 %s101, 1
        %s354 = scalar_lea.sflag [#allocation4], %s353
        %s355 = sand.u32 %s101, 1
        %s356 = smul.addr %s355, 8
        %s357 = scalar_lea.vmem [#allocation5], %s356
        %p358 = scmp.lt.s32.totalorder %s20, 1
        %s359 = scalar_select %p358, %s20, 1
        %s360 = smul.addr %s359, 8
        %s361 = scalar_lea.vmem %s4, %s360
        // Predicated region
        $region37: #{tpu_custom_call.1} parent=31 // pred_check
          %p362 = pneg %p111
        $region38: #{tpu_custom_call.1} parent=31 // pred_check_branch
          %364 = sbr.rel (%p362) target = $region40
        $region39: #{tpu_custom_call.1} parent=31 // pred_region
          %s366 = ssub.s32 128, 128
          %367 = vsyncadd %s354, %s366
          %s368 = smul.addr %s20, 128
          %s369 = scalar_lea.hbm %s3, %s368
          %s371 = sshll.u32 %s357, 4
          %s372 = int_to_ptr.vmem [resolvable:$true] %s371
          %374 = dma.vmem_to_hbm [thread:$0]  %s372, 128, %s369, %s354
        $region40: #{tpu_custom_call.1} parent=31 // pred_fallthru
          _
        // Predicated region
        $region41: #{tpu_custom_call.1} parent=31 // pred_check
          %p375 = pneg %p137
        $region42: #{tpu_custom_call.1} parent=31 // pred_check_branch
          %377 = sbr.rel (%p375) target = $region44
        $region43: #{tpu_custom_call.1} parent=31 // pred_region
          _
        $region44: #{tpu_custom_call.1} parent=31 // pred_fallthru
          _
      $region32: #{tpu_custom_call.1} parent=5 // pred_fallthru
        _
      %p378 = scmp.le.s32.totalorder 2, %s15
      // Predicated region
      $region45: #{tpu_custom_call.1} parent=5 // pred_check
        %p379 = pneg %p378
      $region46: #{tpu_custom_call.1} parent=5 // pred_check_branch
        %381 = sbr.rel (%p379) target = $region48
      $region47: #{tpu_custom_call.1} parent=5 // pred_region
        %s382 = ssub.s32 %s15, 2
        // Predicated region
        $region49: #{tpu_custom_call.1} parent=47 // pred_check
          %p383 = pneg %p117
        $region50: #{tpu_custom_call.1} parent=47 // pred_check_branch
          %385 = sbr.rel (%p383) target = $region52
        $region51: #{tpu_custom_call.1} parent=47 // pred_region
          %s386 = sand.u32 %s102, 1
          %s387 = scalar_lea.sflag [#allocation4], %s386
          %s388 = sand.u32 %s102, 1
          %s389 = smul.addr %s388, 8
          %s390 = scalar_lea.vmem [#allocation5], %s389
          %391 = dma.done %s387, 128
        $region52: #{tpu_custom_call.1} parent=47 // pred_fallthru
          _
        // Predicated region
        $region53: #{tpu_custom_call.1} parent=47 // pred_check
          %p392 = pneg %p143
        $region54: #{tpu_custom_call.1} parent=47 // pred_check_branch
          %394 = sbr.rel (%p392) target = $region56
        $region55: #{tpu_custom_call.1} parent=47 // pred_region
          %p395 = scmp.lt.s32.totalorder %s21, 1
          %s396 = scalar_select %p395, %s21, 1
          %s397 = smul.addr %s396, 8
          %s398 = scalar_lea.vmem %s4, %s397
        $region56: #{tpu_custom_call.1} parent=47 // pred_fallthru
          _
      $region48: #{tpu_custom_call.1} parent=5 // pred_fallthru
        _
    $region6: #{tpu_custom_call.1} parent=1 // loop_footer
      %s19 = sadd.s32 1, %s15
    $region7: #{tpu_custom_call.1} parent=1 // loop_footer_branch
      %14 = sbr.rel target = $region3
    $region8: #{tpu_custom_call.1} parent=1 // loop_exit
      _
    %399 = vsyncpa [#allocation3], 1
    %s400 = scalar_lea.sflag [#allocation3], 1
    %401 = vsyncpa %s400, 1
    %402 = vsyncpa [#allocation4], 1
    %s403 = scalar_lea.sflag [#allocation4], 1
    %404 = vsyncpa %s403, 1

</llo_original>
